<compile_context>
chip_gen: v7x
topology: tpu7x:2x2x1
jax: 0.10.0
libtpu: 0.0.40
codegen_flags: <defaults>
</compile_context>

<pallas_src>
import functools

import jax
import jax.numpy as jnp
import numpy as np
from jax.experimental import pallas as pl
from jax.experimental.pallas import tpu as pltpu

# Deterministic "config" (the module's __init__ is empty; these attrs come from its cfg).
CLS_TOKEN_ID = 101
SEP_TOKEN_ID = 102
PAD_TOKEN_ID = 0
MAX_LENGTH = 128  # S (lane dim, multiple of 128)


def _round_up(x, m):
    return ((x + m - 1) // m) * m


def _preproc_kernel(ql_ref, dl_ref, q_ref, d_ref,          # inputs  (VMEM)
                    tok_ref, mask_ref, pos_ref,             # outputs (VMEM)
                    q_slab_ref, d_slab_ref,                 # scratch (VMEM)
                    *, cls_id, sep_id, pad_id):
    TB, S = tok_ref.shape
    Lq = q_ref.shape[1]
    Ld = d_ref.shape[1]

    lq = ql_ref[...]                                        # (TB, 1) int32
    ld = dl_ref[...]                                        # (TB, 1) int32
    # document truncation: d = d[:max_length - len(q) - 2]  (only shrinks)
    ld_eff = jnp.maximum(jnp.minimum(ld, S - lq - 2), 0)
    total = lq + ld_eff + 2                                 # (TB, 1)

    # Stage the narrow token rows into S-wide slabs (lane-aligned partial stores).
    # Lanes >= Lq / >= Ld are left stale on purpose: every slab lane selected by the
    # where-chain below comes from the freshly written region, so no zero-fill needed.
    q_slab_ref[:, pl.ds(0, Lq)] = q_ref[...]
    d_slab_ref[:, pl.ds(0, Ld)] = d_ref[...]

    j = jax.lax.broadcasted_iota(jnp.int32, (TB, S), 1)

    # q lands at output lanes [1, lq]: uniform offset -> single constant roll of the tile.
    q_shift = pltpu.roll(q_slab_ref[...], shift=1, axis=1)

    # d lands at output lanes [lq+2, total): per-row circular shift by lq+2, built as a
    # barrel shifter: log2(S) constant rolls (XLU, whole tile) + per-row selects (VPU),
    # fully vectorized over the TB rows -- no per-row dynamic rolls.
    shift = lq + 2                                          # (TB, 1), in [2, S]
    d_shift = d_slab_ref[...]
    for k in range((S - 1).bit_length()):
        rolled = pltpu.roll(d_shift, shift=1 << k, axis=1)
        take = ((shift >> k) & 1) == 1                      # (TB, 1) bool
        d_shift = jnp.where(take, rolled, d_shift)

    tok = jnp.where(j == 0, cls_id,
          jnp.where(j <= lq, q_shift,
          jnp.where(j == lq + 1, sep_id,
          jnp.where(j < total, d_shift, pad_id))))

    # positions: range(0, len(q)+1) covers [CLS]+q, range(0, len(d)+1) covers [SEP]+d, pad=0
    pos = jnp.where(j <= lq, j,
          jnp.where(j < total, j - lq - 1, 0))

    tok_ref[...] = tok
    mask_ref[...] = (j < total).astype(jnp.float32)
    pos_ref[...] = pos


def bert_data_preprocess(query_tokens, query_lens, doc_tokens, doc_lens,
                         *, max_length=MAX_LENGTH,
                         cls_id=CLS_TOKEN_ID, sep_id=SEP_TOKEN_ID, pad_id=PAD_TOKEN_ID,
                         block_rows=None):
    """Returns (bert_input (B,S) i32, attention_mask (B,S) f32, positions (B,S) i32)."""
    B, Lq = query_tokens.shape
    _, Ld = doc_tokens.shape
    S = max_length
    assert S % 128 == 0, "max_length must be a multiple of 128 (TPU lane width)"
    assert 1 <= Lq and Lq + 2 <= S, "query width must leave room for [CLS]/[SEP]"
    assert Ld >= 1

    # Doc columns past S-2 can never survive truncation -- drop them before any DMA.
    if Ld > S - 2:
        doc_tokens = doc_tokens[:, :S - 2]
        Ld = S - 2

    # Clamp lengths to the token-matrix widths (out-of-range lens would otherwise read
    # padding columns as real tokens with mask=1).
    ql = jnp.clip(query_lens.astype(jnp.int32), 0, Lq).reshape(B, 1)
    dl = jnp.clip(doc_lens.astype(jnp.int32), 0, Ld).reshape(B, 1)
    q_tok = query_tokens.astype(jnp.int32)
    d_tok = doc_tokens.astype(jnp.int32)

    # Row block: multiple of 8 sublanes; whole batch in a single grid step when small
    # (<= 1024 rows keeps all double-buffered outputs + scratch well under scoped VMEM,
    #  including v7x's smaller 64 MiB physical VMEM).
    if block_rows is None:
        TB = min(1024, _round_up(B, 8))
    else:
        assert block_rows % 8 == 0
        TB = block_rows
    B_pad = _round_up(B, TB)
    if B_pad != B:
        pad_rows = B_pad - B
        q_tok = jnp.pad(q_tok, ((0, pad_rows), (0, 0)))
        d_tok = jnp.pad(d_tok, ((0, pad_rows), (0, 0)))
        ql = jnp.pad(ql, ((0, pad_rows), (0, 0)))
        dl = jnp.pad(dl, ((0, pad_rows), (0, 0)))

    kernel = functools.partial(_preproc_kernel, cls_id=cls_id, sep_id=sep_id, pad_id=pad_id)

    row_map = lambda i: (i, 0)
    out_spec = pl.BlockSpec((TB, S), row_map)
    grid_spec = pltpu.PrefetchScalarGridSpec(
        num_scalar_prefetch=0,
        grid=(B_pad // TB,),
        in_specs=[pl.BlockSpec((TB, 1), row_map),     # query lens
                  pl.BlockSpec((TB, 1), row_map),     # doc lens
                  pl.BlockSpec((TB, Lq), row_map),    # query tokens (native width)
                  pl.BlockSpec((TB, Ld), row_map)],   # doc tokens   (native width)
        out_specs=(out_spec, out_spec, out_spec),
        scratch_shapes=[pltpu.VMEM((TB, S), jnp.int32),
                        pltpu.VMEM((TB, S), jnp.int32)],
    )
    tok, mask, pos = pl.pallas_call(
        kernel,
        out_shape=(jax.ShapeDtypeStruct((B_pad, S), jnp.int32),
                   jax.ShapeDtypeStruct((B_pad, S), jnp.float32),
                   jax.ShapeDtypeStruct((B_pad, S), jnp.int32)),
        grid_spec=grid_spec,
        compiler_params=pltpu.CompilerParams(
            dimension_semantics=("parallel",)),   # rows independent -> v7x splits over 2 TCs
    )(ql, dl, q_tok, d_tok)

    return tok[:B], mask[:B], pos[:B]


def _reference(q, ql, d, dl, S, cls_id, sep_id, pad_id):
    B = q.shape[0]
    tok = np.full((B, S), pad_id, np.int32)
    mask = np.zeros((B, S), np.float32)
    pos = np.zeros((B, S), np.int32)
    for b in range(B):
        qq = list(q[b, :ql[b]])
        dd = list(d[b, :dl[b]])
        if len(qq) + len(dd) + 2 > S:
            dd = dd[: S - len(qq) - 2]
        seq = [cls_id] + qq + [sep_id] + dd
        p = list(range(0, len(qq) + 1)) + list(range(0, len(dd) + 1))
        tok[b, :len(seq)] = seq
        pos[b, :len(p)] = p
        mask[b, :len(seq)] = 1.0
    return tok, mask, pos


if __name__ == "__main__":
    key = jax.random.PRNGKey(0)
    k1, k2, k3, k4 = jax.random.split(key, 4)

    B, Lq, Ld = 4, 8, 16
    query_tokens = jax.random.randint(k1, (B, Lq), 1000, 2000, dtype=jnp.int32)
    doc_tokens = jax.random.randint(k2, (B, Ld), 2000, 3000, dtype=jnp.int32)
    query_lens = jax.random.randint(k3, (B,), 3, Lq + 1, dtype=jnp.int32)
    doc_lens = jax.random.randint(k4, (B,), 5, Ld + 1, dtype=jnp.int32)

    tok, mask, pos = bert_data_preprocess(query_tokens, query_lens, doc_tokens, doc_lens)
    jax.block_until_ready((tok, mask, pos))

    ref_tok, ref_mask, ref_pos = _reference(
        np.asarray(query_tokens), np.asarray(query_lens),
        np.asarray(doc_tokens), np.asarray(doc_lens),
        MAX_LENGTH, CLS_TOKEN_ID, SEP_TOKEN_ID, PAD_TOKEN_ID)

    np.testing.assert_array_equal(np.asarray(tok), ref_tok)
    np.testing.assert_array_equal(np.asarray(mask), ref_mask)
    np.testing.assert_array_equal(np.asarray(pos), ref_pos)

    # TODO(synk): original pads to the per-batch max length (PaddedSequence.autopad);
    # here we pad to the static max_length — the attention mask is identical on the valid region.
    print("KERNEL_OK")
</pallas_src>

<mosaic_0001>
module attributes {stable_mosaic.version = 11 : i64} {
  func.func @_preproc_kernel(%arg0: i32, %arg1: memref<8x1xi32, #tpu.memory_space<vmem>>, %arg2: memref<8x1xi32, #tpu.memory_space<vmem>>, %arg3: memref<8x8xi32, #tpu.memory_space<vmem>>, %arg4: memref<8x16xi32, #tpu.memory_space<vmem>>, %arg5: memref<8x128xi32, #tpu.memory_space<vmem>>, %arg6: memref<8x128xf32, #tpu.memory_space<vmem>>, %arg7: memref<8x128xi32, #tpu.memory_space<vmem>>, %arg8: memref<8x128xi32, #tpu.memory_space<vmem>>, %arg9: memref<8x128xi32, #tpu.memory_space<vmem>>) attributes {dimension_semantics = [#tpu.dimension_semantics<parallel>], iteration_bounds = array<i64: 1>, scalar_prefetch = 0 : i64, scratch_operands = 2 : i64, tpu.core_type = #tpu.core_type<tc>, window_params = [{transform_indices = @transform_0, window_bounds = array<i64: 8, 1>}, {transform_indices = @transform_1, window_bounds = array<i64: 8, 1>}, {transform_indices = @transform_2, window_bounds = array<i64: 8, 8>}, {transform_indices = @transform_3, window_bounds = array<i64: 8, 16>}, {transform_indices = @transform_4, window_bounds = array<i64: 8, 128>}, {transform_indices = @transform_5, window_bounds = array<i64: 8, 128>}, {transform_indices = @transform_6, window_bounds = array<i64: 8, 128>}]} {
    %c0 = arith.constant 0 : index
    %c0_0 = arith.constant 0 : index
    %0 = vector.load %arg1[%c0, %c0_0] : memref<8x1xi32, #tpu.memory_space<vmem>>, vector<8x1xi32>
    %c0_1 = arith.constant 0 : index
    %c0_2 = arith.constant 0 : index
    %1 = vector.load %arg2[%c0_1, %c0_2] : memref<8x1xi32, #tpu.memory_space<vmem>>, vector<8x1xi32>
    %c128_i32 = arith.constant 128 : i32
    %2 = vector.broadcast %c128_i32 : i32 to vector<8x1xi32>
    %3 = arith.subi %2, %0 : vector<8x1xi32>
    %c2_i32 = arith.constant 2 : i32
    %4 = vector.broadcast %c2_i32 : i32 to vector<8x1xi32>
    %5 = arith.subi %3, %4 : vector<8x1xi32>
    %6 = arith.minsi %1, %5 : vector<8x1xi32>
    %c0_i32 = arith.constant 0 : i32
    %7 = vector.broadcast %c0_i32 : i32 to vector<8x1xi32>
    %8 = arith.maxsi %6, %7 : vector<8x1xi32>
    %9 = arith.addi %0, %8 : vector<8x1xi32>
    %c2_i32_3 = arith.constant 2 : i32
    %10 = vector.broadcast %c2_i32_3 : i32 to vector<8x1xi32>
    %11 = arith.addi %9, %10 : vector<8x1xi32>
    %c0_4 = arith.constant 0 : index
    %c0_5 = arith.constant 0 : index
    %12 = vector.load %arg3[%c0_4, %c0_5] : memref<8x8xi32, #tpu.memory_space<vmem>>, vector<8x8xi32>
    %c0_6 = arith.constant 0 : index
    %c0_7 = arith.constant 0 : index
    %13 = vector.load %arg8[%c0_6, %c0_7] : memref<8x128xi32, #tpu.memory_space<vmem>>, vector<8x8xi32>
    tpu.vector_store %arg8[%c0_6, %c0_7], %12 {strides = array<i32>} : memref<8x128xi32, #tpu.memory_space<vmem>>, vector<8x8xi32>,
    %c0_8 = arith.constant 0 : index
    %c0_9 = arith.constant 0 : index
    %14 = vector.load %arg4[%c0_8, %c0_9] : memref<8x16xi32, #tpu.memory_space<vmem>>, vector<8x16xi32>
    %c0_10 = arith.constant 0 : index
    %c0_11 = arith.constant 0 : index
    %15 = vector.load %arg9[%c0_10, %c0_11] : memref<8x128xi32, #tpu.memory_space<vmem>>, vector<8x16xi32>
    tpu.vector_store %arg9[%c0_10, %c0_11], %14 {strides = array<i32>} : memref<8x128xi32, #tpu.memory_space<vmem>>, vector<8x16xi32>,
    %16 = tpu.iota {dimensions = array<i32: 1>} : vector<8x128xi32>
    %c0_12 = arith.constant 0 : index
    %c0_13 = arith.constant 0 : index
    %17 = vector.load %arg8[%c0_12, %c0_13] : memref<8x128xi32, #tpu.memory_space<vmem>>, vector<8x128xi32>
    %c1_i32 = arith.constant 1 : i32
    %18 = tpu.dynamic_rotate %17 by %c1_i32 dim 1 : vector<8x128xi32>, i32 -> vector<8x128xi32>
    %c2_i32_14 = arith.constant 2 : i32
    %19 = vector.broadcast %c2_i32_14 : i32 to vector<8x1xi32>
    %20 = arith.addi %0, %19 : vector<8x1xi32>
    %c0_15 = arith.constant 0 : index
    %c0_16 = arith.constant 0 : index
    %21 = vector.load %arg9[%c0_15, %c0_16] : memref<8x128xi32, #tpu.memory_space<vmem>>, vector<8x128xi32>
    %c1_i32_17 = arith.constant 1 : i32
    %22 = tpu.dynamic_rotate %21 by %c1_i32_17 dim 1 : vector<8x128xi32>, i32 -> vector<8x128xi32>
    %c0_i32_18 = arith.constant 0 : i32
    %23 = vector.broadcast %c0_i32_18 : i32 to vector<8x1xi32>
    %24 = arith.shrsi %20, %23 : vector<8x1xi32>
    %c1_i32_19 = arith.constant 1 : i32
    %25 = vector.broadcast %c1_i32_19 : i32 to vector<8x1xi32>
    %26 = arith.andi %24, %25 : vector<8x1xi32>
    %c1_i32_20 = arith.constant 1 : i32
    %27 = vector.broadcast %c1_i32_20 : i32 to vector<8x1xi32>
    %28 = arith.cmpi eq, %26, %27 : vector<8x1xi32>
    %29 = vector.shape_cast %28 : vector<8x1xi1> to vector<8x1xi1>
    %30 = vector.broadcast %29 : vector<8x1xi1> to vector<8x128xi1>
    %31 = arith.select %30, %22, %21 : vector<8x128xi1>, vector<8x128xi32>
    %c2_i32_21 = arith.constant 2 : i32
    %32 = tpu.dynamic_rotate %31 by %c2_i32_21 dim 1 : vector<8x128xi32>, i32 -> vector<8x128xi32>
    %c1_i32_22 = arith.constant 1 : i32
    %33 = vector.broadcast %c1_i32_22 : i32 to vector<8x1xi32>
    %34 = arith.shrsi %20, %33 : vector<8x1xi32>
    %c1_i32_23 = arith.constant 1 : i32
    %35 = vector.broadcast %c1_i32_23 : i32 to vector<8x1xi32>
    %36 = arith.andi %34, %35 : vector<8x1xi32>
    %c1_i32_24 = arith.constant 1 : i32
    %37 = vector.broadcast %c1_i32_24 : i32 to vector<8x1xi32>
    %38 = arith.cmpi eq, %36, %37 : vector<8x1xi32>
    %39 = vector.shape_cast %38 : vector<8x1xi1> to vector<8x1xi1>
    %40 = vector.broadcast %39 : vector<8x1xi1> to vector<8x128xi1>
    %41 = arith.select %40, %32, %31 : vector<8x128xi1>, vector<8x128xi32>
    %c4_i32 = arith.constant 4 : i32
    %42 = tpu.dynamic_rotate %41 by %c4_i32 dim 1 : vector<8x128xi32>, i32 -> vector<8x128xi32>
    %c2_i32_25 = arith.constant 2 : i32
    %43 = vector.broadcast %c2_i32_25 : i32 to vector<8x1xi32>
    %44 = arith.shrsi %20, %43 : vector<8x1xi32>
    %c1_i32_26 = arith.constant 1 : i32
    %45 = vector.broadcast %c1_i32_26 : i32 to vector<8x1xi32>
    %46 = arith.andi %44, %45 : vector<8x1xi32>
    %c1_i32_27 = arith.constant 1 : i32
    %47 = vector.broadcast %c1_i32_27 : i32 to vector<8x1xi32>
    %48 = arith.cmpi eq, %46, %47 : vector<8x1xi32>
    %49 = vector.shape_cast %48 : vector<8x1xi1> to vector<8x1xi1>
    %50 = vector.broadcast %49 : vector<8x1xi1> to vector<8x128xi1>
    %51 = arith.select %50, %42, %41 : vector<8x128xi1>, vector<8x128xi32>
    %c8_i32 = arith.constant 8 : i32
    %52 = tpu.dynamic_rotate %51 by %c8_i32 dim 1 : vector<8x128xi32>, i32 -> vector<8x128xi32>
    %c3_i32 = arith.constant 3 : i32
    %53 = vector.broadcast %c3_i32 : i32 to vector<8x1xi32>
    %54 = arith.shrsi %20, %53 : vector<8x1xi32>
    %c1_i32_28 = arith.constant 1 : i32
    %55 = vector.broadcast %c1_i32_28 : i32 to vector<8x1xi32>
    %56 = arith.andi %54, %55 : vector<8x1xi32>
    %c1_i32_29 = arith.constant 1 : i32
    %57 = vector.broadcast %c1_i32_29 : i32 to vector<8x1xi32>
    %58 = arith.cmpi eq, %56, %57 : vector<8x1xi32>
    %59 = vector.shape_cast %58 : vector<8x1xi1> to vector<8x1xi1>
    %60 = vector.broadcast %59 : vector<8x1xi1> to vector<8x128xi1>
    %61 = arith.select %60, %52, %51 : vector<8x128xi1>, vector<8x128xi32>
    %c16_i32 = arith.constant 16 : i32
    %62 = tpu.dynamic_rotate %61 by %c16_i32 dim 1 : vector<8x128xi32>, i32 -> vector<8x128xi32>
    %c4_i32_30 = arith.constant 4 : i32
    %63 = vector.broadcast %c4_i32_30 : i32 to vector<8x1xi32>
    %64 = arith.shrsi %20, %63 : vector<8x1xi32>
    %c1_i32_31 = arith.constant 1 : i32
    %65 = vector.broadcast %c1_i32_31 : i32 to vector<8x1xi32>
    %66 = arith.andi %64, %65 : vector<8x1xi32>
    %c1_i32_32 = arith.constant 1 : i32
    %67 = vector.broadcast %c1_i32_32 : i32 to vector<8x1xi32>
    %68 = arith.cmpi eq, %66, %67 : vector<8x1xi32>
    %69 = vector.shape_cast %68 : vector<8x1xi1> to vector<8x1xi1>
    %70 = vector.broadcast %69 : vector<8x1xi1> to vector<8x128xi1>
    %71 = arith.select %70, %62, %61 : vector<8x128xi1>, vector<8x128xi32>
    %c32_i32 = arith.constant 32 : i32
    %72 = tpu.dynamic_rotate %71 by %c32_i32 dim 1 : vector<8x128xi32>, i32 -> vector<8x128xi32>
    %c5_i32 = arith.constant 5 : i32
    %73 = vector.broadcast %c5_i32 : i32 to vector<8x1xi32>
    %74 = arith.shrsi %20, %73 : vector<8x1xi32>
    %c1_i32_33 = arith.constant 1 : i32
    %75 = vector.broadcast %c1_i32_33 : i32 to vector<8x1xi32>
    %76 = arith.andi %74, %75 : vector<8x1xi32>
    %c1_i32_34 = arith.constant 1 : i32
    %77 = vector.broadcast %c1_i32_34 : i32 to vector<8x1xi32>
    %78 = arith.cmpi eq, %76, %77 : vector<8x1xi32>
    %79 = vector.shape_cast %78 : vector<8x1xi1> to vector<8x1xi1>
    %80 = vector.broadcast %79 : vector<8x1xi1> to vector<8x128xi1>
    %81 = arith.select %80, %72, %71 : vector<8x128xi1>, vector<8x128xi32>
    %c64_i32 = arith.constant 64 : i32
    %82 = tpu.dynamic_rotate %81 by %c64_i32 dim 1 : vector<8x128xi32>, i32 -> vector<8x128xi32>
    %c6_i32 = arith.constant 6 : i32
    %83 = vector.broadcast %c6_i32 : i32 to vector<8x1xi32>
    %84 = arith.shrsi %20, %83 : vector<8x1xi32>
    %c1_i32_35 = arith.constant 1 : i32
    %85 = vector.broadcast %c1_i32_35 : i32 to vector<8x1xi32>
    %86 = arith.andi %84, %85 : vector<8x1xi32>
    %c1_i32_36 = arith.constant 1 : i32
    %87 = vector.broadcast %c1_i32_36 : i32 to vector<8x1xi32>
    %88 = arith.cmpi eq, %86, %87 : vector<8x1xi32>
    %89 = vector.shape_cast %88 : vector<8x1xi1> to vector<8x1xi1>
    %90 = vector.broadcast %89 : vector<8x1xi1> to vector<8x128xi1>
    %91 = arith.select %90, %82, %81 : vector<8x128xi1>, vector<8x128xi32>
    %c0_i32_37 = arith.constant 0 : i32
    %92 = vector.broadcast %c0_i32_37 : i32 to vector<8x128xi32>
    %93 = arith.cmpi eq, %16, %92 : vector<8x128xi32>
    %94 = vector.broadcast %0 : vector<8x1xi32> to vector<8x128xi32>
    %95 = arith.cmpi sle, %16, %94 : vector<8x128xi32>
    %c1_i32_38 = arith.constant 1 : i32
    %96 = vector.broadcast %c1_i32_38 : i32 to vector<8x1xi32>
    %97 = arith.addi %0, %96 : vector<8x1xi32>
    %98 = vector.broadcast %97 : vector<8x1xi32> to vector<8x128xi32>
    %99 = arith.cmpi eq, %16, %98 : vector<8x128xi32>
    %100 = vector.broadcast %11 : vector<8x1xi32> to vector<8x128xi32>
    %101 = arith.cmpi slt, %16, %100 : vector<8x128xi32>
    %c0_i32_39 = arith.constant 0 : i32
    %102 = vector.broadcast %c0_i32_39 : i32 to vector<8x128xi32>
    %103 = arith.select %101, %91, %102 : vector<8x128xi1>, vector<8x128xi32>
    %c102_i32 = arith.constant 102 : i32
    %104 = vector.broadcast %c102_i32 : i32 to vector<8x128xi32>
    %105 = arith.select %99, %104, %103 : vector<8x128xi1>, vector<8x128xi32>
    %106 = arith.select %95, %18, %105 : vector<8x128xi1>, vector<8x128xi32>
    %c101_i32 = arith.constant 101 : i32
    %107 = vector.broadcast %c101_i32 : i32 to vector<8x128xi32>
    %108 = arith.select %93, %107, %106 : vector<8x128xi1>, vector<8x128xi32>
    %109 = vector.broadcast %0 : vector<8x1xi32> to vector<8x128xi32>
    %110 = arith.cmpi sle, %16, %109 : vector<8x128xi32>
    %111 = vector.broadcast %11 : vector<8x1xi32> to vector<8x128xi32>
    %112 = arith.cmpi slt, %16, %111 : vector<8x128xi32>
    %113 = vector.broadcast %0 : vector<8x1xi32> to vector<8x128xi32>
    %114 = arith.subi %16, %113 : vector<8x128xi32>
    %c1_i32_40 = arith.constant 1 : i32
    %115 = vector.broadcast %c1_i32_40 : i32 to vector<8x128xi32>
    %116 = arith.subi %114, %115 : vector<8x128xi32>
    %c0_i32_41 = arith.constant 0 : i32
    %117 = vector.broadcast %c0_i32_41 : i32 to vector<8x128xi32>
    %118 = arith.select %112, %116, %117 : vector<8x128xi1>, vector<8x128xi32>
    %119 = arith.select %110, %16, %118 : vector<8x128xi1>, vector<8x128xi32>
    %c0_42 = arith.constant 0 : index
    %c0_43 = arith.constant 0 : index
    %120 = vector.load %arg5[%c0_42, %c0_43] : memref<8x128xi32, #tpu.memory_space<vmem>>, vector<8x128xi32>
    tpu.vector_store %arg5[%c0_42, %c0_43], %108 {strides = array<i32>} : memref<8x128xi32, #tpu.memory_space<vmem>>, vector<8x128xi32>,
    %121 = vector.broadcast %11 : vector<8x1xi32> to vector<8x128xi32>
    %122 = arith.cmpi slt, %16, %121 : vector<8x128xi32>
    %123 = arith.extui %122 : vector<8x128xi1> to vector<8x128xi32>
    %124 = arith.sitofp %123 : vector<8x128xi32> to vector<8x128xf32>
    %c0_44 = arith.constant 0 : index
    %c0_45 = arith.constant 0 : index
    %125 = vector.load %arg6[%c0_44, %c0_45] : memref<8x128xf32, #tpu.memory_space<vmem>>, vector<8x128xf32>
    tpu.vector_store %arg6[%c0_44, %c0_45], %124 {strides = array<i32>} : memref<8x128xf32, #tpu.memory_space<vmem>>, vector<8x128xf32>,
    %c0_46 = arith.constant 0 : index
    %c0_47 = arith.constant 0 : index
    %126 = vector.load %arg7[%c0_46, %c0_47] : memref<8x128xi32, #tpu.memory_space<vmem>>, vector<8x128xi32>
    tpu.vector_store %arg7[%c0_46, %c0_47], %119 {strides = array<i32>} : memref<8x128xi32, #tpu.memory_space<vmem>>, vector<8x128xi32>,
    return
  }
  func.func @transform_0(%arg0: i32) -> (i32, i32) {
    %c0_i32 = arith.constant 0 : i32
    %c0_i32_0 = arith.constant 0 : i32
    return %arg0, %c0_i32 : i32, i32
  }
  func.func @transform_1(%arg0: i32) -> (i32, i32) {
    %c0_i32 = arith.constant 0 : i32
    %c0_i32_0 = arith.constant 0 : i32
    return %arg0, %c0_i32 : i32, i32
  }
  func.func @transform_2(%arg0: i32) -> (i32, i32) {
    %c0_i32 = arith.constant 0 : i32
    %c0_i32_0 = arith.constant 0 : i32
    return %arg0, %c0_i32 : i32, i32
  }
  func.func @transform_3(%arg0: i32) -> (i32, i32) {
    %c0_i32 = arith.constant 0 : i32
    %c0_i32_0 = arith.constant 0 : i32
    return %arg0, %c0_i32 : i32, i32
  }
  func.func @transform_4(%arg0: i32) -> (i32, i32) {
    %c0_i32 = arith.constant 0 : i32
    %c0_i32_0 = arith.constant 0 : i32
    return %arg0, %c0_i32 : i32, i32
  }
  func.func @transform_5(%arg0: i32) -> (i32, i32) {
    %c0_i32 = arith.constant 0 : i32
    %c0_i32_0 = arith.constant 0 : i32
    return %arg0, %c0_i32 : i32, i32
  }
  func.func @transform_6(%arg0: i32) -> (i32, i32) {
    %c0_i32 = arith.constant 0 : i32
    %c0_i32_0 = arith.constant 0 : i32
    return %arg0, %c0_i32 : i32, i32
  }
}

</mosaic_0001>

<llo_original>
// kernel: tpu_custom_call.1
$region0: #{tpu_custom_call.1}
  #allocation0 [shape = 'u32[]', space=smem, size = 0x4, offset = 0x4, fixed_abs, tag = 'smem constant byte address 0x4 - core index']
  #allocation1 [shape = 'u32[144,128]{1,0:T(1,128)}', space=vmem, size = 0x12000, scoped, tag = 'internal scratch']
  #allocation2 [shape = 's32[8,128]{1,0:T(8,128)}', space=vmem, size = 0x1000, scoped, tag = 'scratch operand']
  #allocation3 [shape = 's32[8,128]{1,0:T(8,128)}', space=vmem, size = 0x1000, scoped, tag = 'scratch operand']
  %s0 = inlined_call_operand.vmem [shape: s32[8,1], index: 0, kind: input, shape index: {}]
  %s1 = inlined_call_operand.vmem [shape: s32[8,1], index: 1, kind: input, shape index: {}]
  %s2 = inlined_call_operand.vmem [shape: s32[8,8], index: 2, kind: input, shape index: {}]
  %s3 = inlined_call_operand.vmem [shape: s32[8,16], index: 3, kind: input, shape index: {}]
  %s4 = inlined_call_operand.hbm [shape: s32[8,128], index: 4, kind: output, shape index: {0}]
  %s5 = inlined_call_operand.hbm [shape: f32[8,128], index: 5, kind: output, shape index: {1}]
  %s6 = inlined_call_operand.hbm [shape: s32[8,128], index: 6, kind: output, shape index: {2}]
  %7 = xla_tuple %s4, %s5, %s6
  %s8 = sld [smem:[#allocation0]]
  $region42: #{tpu_custom_call.1} parent=0
    _
  %s10 = ssub.s32 1, %s8
  %s11 = scalar_select 0, %s10, %s8
  $region1: #{tpu_custom_call.1} parent=0
    #allocation4 [shape = 'u8[4096]{0}', space=vmem, size = 0x1000, scoped, tag = 'output window, operand 0, single buffered']
    #allocation5 [shape = 's32[1]{0}', space=sflag, size = 0x4, scoped, tag = 'scoped memory for tpu_custom_call.1']
    #allocation6 [shape = 'u8[4096]{0}', space=vmem, size = 0x1000, scoped, tag = 'output window, operand 1, single buffered']
    #allocation7 [shape = 's32[1]{0}', space=sflag, size = 0x4, scoped, tag = 'scoped memory for tpu_custom_call.1']
    #allocation8 [shape = 'u8[4096]{0}', space=vmem, size = 0x1000, scoped, tag = 'output window, operand 2, single buffered']
    %12 = vsyncpa [#allocation5], 0
    %13 = vsyncpa [#allocation7], 0
    // Predicated region
    $region2: #{tpu_custom_call.1} parent=1 // pred_check
      _
    $region3: #{tpu_custom_call.1} parent=1 // pred_check_branch
      %15 = sbr.rel (0) target = $region5
    $region4: #{tpu_custom_call.1} parent=1 // pred_region
      _
    $region5: #{tpu_custom_call.1} parent=1 // pred_fallthru
      _
    // Predicated region
    $region6: #{tpu_custom_call.1} parent=1 // pred_check
      _
    $region7: #{tpu_custom_call.1} parent=1 // pred_check_branch
      %17 = sbr.rel (0) target = $region9
    $region8: #{tpu_custom_call.1} parent=1 // pred_region
      _
    $region9: #{tpu_custom_call.1} parent=1 // pred_fallthru
      _
    // Predicated region
    $region10: #{tpu_custom_call.1} parent=1 // pred_check
      _
    $region11: #{tpu_custom_call.1} parent=1 // pred_check_branch
      %19 = sbr.rel (0) target = $region13
    $region12: #{tpu_custom_call.1} parent=1 // pred_region
      _
    $region13: #{tpu_custom_call.1} parent=1 // pred_fallthru
      _
    // Predicated region
    $region14: #{tpu_custom_call.1} parent=1 // pred_check
      _
    $region15: #{tpu_custom_call.1} parent=1 // pred_check_branch
      %21 = sbr.rel (0) target = $region17
    $region16: #{tpu_custom_call.1} parent=1 // pred_region
      _
    $region17: #{tpu_custom_call.1} parent=1 // pred_fallthru
      _
    %v22 = vld [vmem:[%s0] sm:$0xff]
    %v23 = vld [vmem:[%s1] sm:$0xff]
    %v24 = vsub.s32 128, %v22
    %v25 = vsub.s32 %v24, 2
    %vm26 = vcmp.lt.s32.totalorder %v23, %v25
    %v27 = vsel %vm26, %v23, %v25
    %vm28 = vcmp.gt.s32.totalorder %v27, 0
    %v29 = vsel %vm28, %v27, 0
    %v30 = vadd.s32 %v22, %v29
    %v31 = vadd.s32 %v30, 2
    %v32 = vld [vmem:[%s2] sm:$0xff]
    %vm33 = vcmask 64512
    %34 = vst.msk [vmem:[#allocation2] sm:$0xff] %vm33, %v32
    %v35 = vld [vmem:[%s3] sm:$0xff]
    %vm36 = vcmask 130048
    %37 = vst.msk [vmem:[#allocation3] sm:$0xff] %vm36, %v35
    %v38 = vlaneseq
    %v39 = vand.u32 %v38, 127
    %v40 = vld [vmem:[#allocation2] sm:$0xff]
    %41 = vrot.lane.b32.xlu0 %v40, 1
    %v42 = vpop.permute.xlu0 %41
    %v43 = vadd.s32 %v22, 2
    %v44 = vld [vmem:[#allocation3] sm:$0xff]
    %45 = vrot.lane.b32.xlu0 %v44, 1
    %v46 = vpop.permute.xlu0 %45
    %v47 = vand.u32 %v43, 1
    %vm48 = vcmp.eq.s32.totalorder %v47, 1
    %v49 = vsel %vm48, 1, 0
    %50 = vset.pattern.permute.xlu0 0
    %51 = vperm.xlu0 %50, %v49
    %v52 = vpop.permute.xlu0 %51
    %vm53 = vcmp.eq.s32.totalorder %v52, 1
    %v54 = vsel %vm53, %v46, %v44
    %55 = vrot.lane.b32.xlu0 %v54, 2
    %v56 = vpop.permute.xlu0 %55
    %v57 = vshra.s32 %v43, 1
    %v58 = vand.u32 %v57, 1
    %vm59 = vcmp.eq.s32.totalorder %v58, 1
    %v60 = vsel %vm59, 1, 0
    %61 = vset.pattern.permute.xlu0 0
    %62 = vperm.xlu0 %61, %v60
    %v63 = vpop.permute.xlu0 %62
    %vm64 = vcmp.eq.s32.totalorder %v63, 1
    %v65 = vsel %vm64, %v56, %v54
    %66 = vrot.lane.b32.xlu0 %v65, 4
    %v67 = vpop.permute.xlu0 %66
    %v68 = vshra.s32 %v43, 2
    %v69 = vand.u32 %v68, 1
    %vm70 = vcmp.eq.s32.totalorder %v69, 1
    %v71 = vsel %vm70, 1, 0
    %72 = vset.pattern.permute.xlu0 0
    %73 = vperm.xlu0 %72, %v71
    %v74 = vpop.permute.xlu0 %73
    %vm75 = vcmp.eq.s32.totalorder %v74, 1
    %v76 = vsel %vm75, %v67, %v65
    %77 = vrot.lane.b32.xlu0 %v76, 8
    %v78 = vpop.permute.xlu0 %77
    %v79 = vshra.s32 %v43, 3
    %v80 = vand.u32 %v79, 1
    %vm81 = vcmp.eq.s32.totalorder %v80, 1
    %v82 = vsel %vm81, 1, 0
    %83 = vset.pattern.permute.xlu0 0
    %84 = vperm.xlu0 %83, %v82
    %v85 = vpop.permute.xlu0 %84
    %vm86 = vcmp.eq.s32.totalorder %v85, 1
    %v87 = vsel %vm86, %v78, %v76
    %88 = vrot.lane.b32.xlu0 %v87, 16
    %v89 = vpop.permute.xlu0 %88
    %v90 = vshra.s32 %v43, 4
    %v91 = vand.u32 %v90, 1
    %vm92 = vcmp.eq.s32.totalorder %v91, 1
    %v93 = vsel %vm92, 1, 0
    %94 = vset.pattern.permute.xlu0 0
    %95 = vperm.xlu0 %94, %v93
    %v96 = vpop.permute.xlu0 %95
    %vm97 = vcmp.eq.s32.totalorder %v96, 1
    %v98 = vsel %vm97, %v89, %v87
    %99 = vrot.lane.b32.xlu0 %v98, 32
    %v100 = vpop.permute.xlu0 %99
    %v101 = vshra.s32 %v43, 5
    %v102 = vand.u32 %v101, 1
    %vm103 = vcmp.eq.s32.totalorder %v102, 1
    %v104 = vsel %vm103, 1, 0
    %105 = vset.pattern.permute.xlu0 0
    %106 = vperm.xlu0 %105, %v104
    %v107 = vpop.permute.xlu0 %106
    %vm108 = vcmp.eq.s32.totalorder %v107, 1
    %v109 = vsel %vm108, %v100, %v98
    %110 = vrot.lane.b32.xlu0 %v109, 64
    %v111 = vpop.permute.xlu0 %110
    %v112 = vshra.s32 %v43, 6
    %v113 = vand.u32 %v112, 1
    %vm114 = vcmp.eq.s32.totalorder %v113, 1
    %v115 = vsel %vm114, 1, 0
    %116 = vset.pattern.permute.xlu0 0
    %117 = vperm.xlu0 %116, %v115
    %v118 = vpop.permute.xlu0 %117
    %vm119 = vcmp.eq.s32.totalorder %v118, 1
    %v120 = vsel %vm119, %v111, %v109
    %vm121 = vcmp.eq.s32.totalorder %v39, 0
    %122 = vset.pattern.permute.xlu0 0
    %123 = vperm.xlu0 %122, %v22
    %v124 = vpop.permute.xlu0 %123
    %vm125 = vcmp.le.s32.totalorder %v39, %v124
    %v126 = vadd.s32 %v22, 1
    %127 = vset.pattern.permute.xlu0 0
    %128 = vperm.xlu0 %127, %v126
    %v129 = vpop.permute.xlu0 %128
    %vm130 = vcmp.eq.s32.totalorder %v39, %v129
    %131 = vset.pattern.permute.xlu0 0
    %132 = vperm.xlu0 %131, %v31
    %v133 = vpop.permute.xlu0 %132
    %vm134 = vcmp.lt.s32.totalorder %v39, %v133
    %v135 = vsel %vm134, %v120, 0
    %v136 = vsel %vm130, 102, %v135
    %v137 = vsel %vm125, %v42, %v136
    %v138 = vsel %vm121, 101, %v137
    %v139 = vsub.s32 %v39, %v124
    %v140 = vsub.s32 %v139, 1
    %v141 = vsel %vm134, %v140, 0
    %v142 = vsel %vm125, %v39, %v141
    %143 = vst [vmem:[#allocation4] sm:$0xff] %v138
    %v144 = vsel %vm134, 1, 0
    %v145 = vcvt.s32.f32 %v144
    %146 = vst [vmem:[#allocation6] sm:$0xff] %v145
    %147 = vst [vmem:[#allocation8] sm:$0xff] %v142
    // Predicated region
    $region18: #{tpu_custom_call.1} parent=1 // pred_check
      _
    $region19: #{tpu_custom_call.1} parent=1 // pred_check_branch
      %149 = sbr.rel (0) target = $region21
    $region20: #{tpu_custom_call.1} parent=1 // pred_region
      %s151 = ssub.s32 128, 128
      %152 = vsyncadd [#allocation5], %s151
      %s154 = sshll.u32 [#allocation4], 4
      %s155 = int_to_ptr.vmem [resolvable:$true] %s154
      %157 = dma.vmem_to_hbm [thread:$0]  %s155, 128, %s4, [#allocation5]
    $region21: #{tpu_custom_call.1} parent=1 // pred_fallthru
      _
    // Predicated region
    $region22: #{tpu_custom_call.1} parent=1 // pred_check
      _
    $region23: #{tpu_custom_call.1} parent=1 // pred_check_branch
      %159 = sbr.rel (0) target = $region25
    $region24: #{tpu_custom_call.1} parent=1 // pred_region
      %s161 = ssub.s32 128, 128
      %162 = vsyncadd [#allocation7], %s161
      %s164 = sshll.u32 [#allocation6], 4
      %s165 = int_to_ptr.vmem [resolvable:$true] %s164
      %167 = dma.vmem_to_hbm [thread:$0]  %s165, 128, %s5, [#allocation7]
    $region25: #{tpu_custom_call.1} parent=1 // pred_fallthru
      _
    // Predicated region
    $region26: #{tpu_custom_call.1} parent=1 // pred_check
      _
    $region27: #{tpu_custom_call.1} parent=1 // pred_check_branch
      %169 = sbr.rel (0) target = $region29
    $region28: #{tpu_custom_call.1} parent=1 // pred_region
      %s171 = ssub.s32 128, 128
      %172 = vsyncadd [#allocation7], %s171
      %s174 = sshll.u32 [#allocation8], 4
      %s175 = int_to_ptr.vmem [resolvable:$true] %s174
      %177 = dma.vmem_to_hbm [thread:$0]  %s175, 128, %s6, [#allocation7]
    $region29: #{tpu_custom_call.1} parent=1 // pred_fallthru
      _
    // Predicated region
    $region30: #{tpu_custom_call.1} parent=1 // pred_check
      _
    $region31: #{tpu_custom_call.1} parent=1 // pred_check_branch
      %179 = sbr.rel (0) target = $region33
    $region32: #{tpu_custom_call.1} parent=1 // pred_region
      %180 = dma.done [#allocation5], 128
    $region33: #{tpu_custom_call.1} parent=1 // pred_fallthru
      _
    // Predicated region
    $region34: #{tpu_custom_call.1} parent=1 // pred_check
      _
    $region35: #{tpu_custom_call.1} parent=1 // pred_check_branch
      %182 = sbr.rel (0) target = $region37
    $region36: #{tpu_custom_call.1} parent=1 // pred_region
      %183 = dma.done [#allocation7], 128
    $region37: #{tpu_custom_call.1} parent=1 // pred_fallthru
      _
    // Predicated region
    $region38: #{tpu_custom_call.1} parent=1 // pred_check
      _
    $region39: #{tpu_custom_call.1} parent=1 // pred_check_branch
      %185 = sbr.rel (0) target = $region41
    $region40: #{tpu_custom_call.1} parent=1 // pred_region
      %186 = dma.done [#allocation7], 128
    $region41: #{tpu_custom_call.1} parent=1 // pred_fallthru
      _
    %187 = vsyncpa [#allocation5], 1
    %188 = vsyncpa [#allocation7], 1

</llo_original>
